<compile_context>
chip_gen: v6e
topology: v6e:2x2x1
jax: 0.10.0
libtpu: 0.0.40
codegen_flags: <defaults>
</compile_context>

<pallas_src>
import functools

import numpy as np
import jax
import jax.numpy as jnp
from jax import lax
from jax.experimental import pallas as pl
from jax.experimental.pallas import tpu as pltpu


NEG_SLOPE = 0.2   # LeakyReLU slope (matches nn.LeakyReLU(0.2))
BN_EPS = 1e-5     # matches nn.BatchNorm1d default


# ----------------------------------------------------------------------------
# Fused Pallas kernel
# ----------------------------------------------------------------------------
def _conv_bn_lrelu(a, w_ref, bgb_ref, *, c_in, l_in, batch, use_bn):
    """One Conv1d(k=4, s=2, p=1) [+ BatchNorm1d] + LeakyReLU(0.2) block.

    a      : (c_in, l_in*batch)   f32 activation, lane index = l*batch + b
    w_ref  : (c_out, 4*c_in)      bf16 conv weights, 4 taps folded into K
    bgb_ref: (c_out, 3)           f32: [:,0]=bias, [:,1]=gamma, [:,2]=beta
    returns: (c_out, (l_in//2)*batch) f32
    """
    B = batch
    l_out = l_in // 2

    # --- im2col via static lane-block slices (no selection matrices) --------
    # Output position l, tap t needs input position 2l-1+t (zero padded).
    even = [a[:, (2 * m) * B:(2 * m + 1) * B] for m in range(l_out)]       # pos 2m
    odd = [a[:, (2 * m + 1) * B:(2 * m + 2) * B] for m in range(l_out)]    # pos 2m+1
    e_cat = jnp.concatenate(even, axis=1) if l_out > 1 else even[0]
    o_cat = jnp.concatenate(odd, axis=1) if l_out > 1 else odd[0]
    zblk = jnp.zeros((c_in, B), a.dtype)
    # tap0 = pos 2l-1  -> odd blocks shifted right one block (zero at l=0)
    # tap3 = pos 2l+2  -> even blocks shifted left one block (zero at l=L_out-1)
    p0 = jnp.concatenate([zblk, o_cat[:, :-B]], axis=1) if l_out > 1 else zblk
    p3 = jnp.concatenate([e_cat[:, B:], zblk], axis=1) if l_out > 1 else zblk
    patch = jnp.concatenate([p0, e_cat, o_cat, p3], axis=0)   # (4*c_in, l_out*B)

    # --- one MXU matmul per layer (K = 4*c_in, f32 accumulation) ------------
    y = jnp.dot(w_ref[...], patch.astype(jnp.bfloat16),
                preferred_element_type=jnp.float32)           # (c_out, l_out*B)

    bgb = bgb_ref[...]
    y = y + bgb[:, 0:1]                                        # conv bias
    if use_bn:
        # Training-mode BatchNorm1d over (B, L) == all lanes; one-pass stats.
        inv_n = 1.0 / float(l_out * B)
        mean = jnp.sum(y, axis=1, keepdims=True) * inv_n
        ex2 = jnp.sum(y * y, axis=1, keepdims=True) * inv_n
        var = jnp.maximum(ex2 - mean * mean, 0.0)
        y = (y - mean) * lax.rsqrt(var + BN_EPS)
        y = y * bgb[:, 1:2] + bgb[:, 2:3]
    return jnp.where(y > 0, y, NEG_SLOPE * y)                  # LeakyReLU(0.2)


def fused_discriminator_kernel(x_ref, w1_ref, w2_ref, w3_ref,
                               bgb1_ref, bgb2_ref, bgb3_ref,
                               wh_ref, bh_ref, o_ref,
                               *, batch, channels, lengths, group_slices):
    c0, c1, c2, c3 = channels
    l0, l1, l2, l3 = lengths

    # Conv stack: every intermediate activation stays in VMEM / vregs.
    a1 = _conv_bn_lrelu(x_ref[...], w1_ref, bgb1_ref,
                        c_in=c0, l_in=l0, batch=batch, use_bn=False)
    a2 = _conv_bn_lrelu(a1, w2_ref, bgb2_ref,
                        c_in=c1, l_in=l1, batch=batch, use_bn=True)
    a3 = _conv_bn_lrelu(a2, w3_ref, bgb3_ref,
                        c_in=c2, l_in=l2, batch=batch, use_bn=True)

    # Heads: a3 is (C3, L3*B) with lane index l*B + b.  PyTorch's channel-major
    # flatten x.view(B, -1) is folded into the pre-permuted head weights
    # (column index l*C3 + c), so the whole head stack is ONE matmul.
    feat = (jnp.concatenate([a3[:, l * batch:(l + 1) * batch]
                             for l in range(l3)], axis=0)
            if l3 > 1 else a3)                                  # (L3*C3, B)
    logits = jnp.dot(wh_ref[...], feat.astype(jnp.bfloat16),
                     preferred_element_type=jnp.float32) + bh_ref[...]

    # Row 0: validity head -> sigmoid; remaining rows: one softmax per aux
    # classifier.  Assemble everything and do ONE dense store.
    parts = [1.0 / (1.0 + jnp.exp(-logits[0:1, :]))]
    for start, size in group_slices:
        z = logits[start:start + size, :]
        z = z - jnp.max(z, axis=0, keepdims=True)
        e = jnp.exp(z)
        parts.append(e / jnp.sum(e, axis=0, keepdims=True))
    o_ref[...] = (jnp.concatenate(parts, axis=0)
                  if len(parts) > 1 else parts[0])


# ----------------------------------------------------------------------------
# pallas_call wrapper (no grid: single-buffered, everything resident in VMEM)
# ----------------------------------------------------------------------------
def _vmem_limit_bytes(kparams, meta):
    """Scoped-VMEM limit sized from the real operand + activation footprint."""
    B = meta["batch"]
    chans = meta["channels"]
    lens = meta["lengths"]
    total = sum(int(np.prod(v.shape)) * v.dtype.itemsize
                for v in kparams.values())
    total += chans[0] * lens[0] * B * 4                         # input activation
    for i in range(3):
        total += chans[i] * lens[i] * B * 4                     # layer input (f32)
        total += 4 * chans[i] * lens[i + 1] * B * 4             # im2col patch
        total += chans[i + 1] * lens[i + 1] * B * 4             # layer output (f32)
    total += chans[3] * lens[3] * B * 4 + meta["n_heads"] * B * 4
    return int(min(64 << 20, max(16 << 20, 4 * total)))         # v7x-safe cap


def make_forward(kparams, meta):
    batch = meta["batch"]
    c0 = meta["channels"][0]
    l0 = meta["lengths"][0]
    n_heads = meta["n_heads"]
    aux_layout = meta["aux_layout"]

    kern = functools.partial(fused_discriminator_kernel,
                             batch=batch,
                             channels=meta["channels"],
                             lengths=meta["lengths"],
                             group_slices=tuple(meta["group_slices"]))

    operands = (kparams["w1"], kparams["w2"], kparams["w3"],
                kparams["bgb1"], kparams["bgb2"], kparams["bgb3"],
                kparams["wh"], kparams["bh"])

    call = pl.pallas_call(
        kern,
        out_shape=jax.ShapeDtypeStruct((n_heads, batch), jnp.float32),
        compiler_params=pltpu.CompilerParams(
            vmem_limit_bytes=_vmem_limit_bytes(kparams, meta)),
    )

    @jax.jit
    def forward(x):
        # (B, L, C) -> lane-dense (C, L*B) with lane index l*B + b.
        # TODO(synk): fold this relayout into the kernel's first im2col so the
        # extra XLA copy of the input disappears.
        a0 = jnp.transpose(x, (2, 1, 0)).reshape(c0, l0 * batch)
        a0 = a0.astype(jnp.float32)
        out = call(a0, *operands)                      # (N_heads, B)
        validity = out[0:1, :].T                       # (B, 1)
        aux = {name: out[s:s + n, :].T for name, s, n in aux_layout}
        return validity, aux

    return forward


# ----------------------------------------------------------------------------
# One-time parameter / constant preparation (pre-packed MXU layouts)
# ----------------------------------------------------------------------------
def init_params(key, window_length, input_dim, base_channels,
                conditioning_var_n_categories):
    """PyTorch-layout parameters (same convention as the nn.Module)."""
    c1, c2, c3 = base_channels // 4, base_channels // 2, base_channels
    keys = jax.random.split(key, 12)
    s = 0.05

    def nrm(k, shape):
        return (s * jax.random.normal(k, shape)).astype(jnp.float32)

    params = {
        "conv1_w": nrm(keys[0], (c1, input_dim, 4)),   # (C_out, C_in, K)
        "conv1_b": nrm(keys[1], (c1,)),
        "conv2_w": nrm(keys[2], (c2, c1, 4)),
        "conv2_b": nrm(keys[3], (c2,)),
        "conv3_w": nrm(keys[4], (c3, c2, 4)),
        "conv3_b": nrm(keys[5], (c3,)),
        "bn2_g": jnp.ones((c2,), jnp.float32),
        "bn2_b": jnp.zeros((c2,), jnp.float32),
        "bn3_g": jnp.ones((c3,), jnp.float32),
        "bn3_b": jnp.zeros((c3,), jnp.float32),
        "fc_w": nrm(keys[6], (1, window_length // 8 * base_channels)),
        "fc_b": nrm(keys[7], (1,)),
        "aux": {},
    }
    aux_keys = jax.random.split(
        keys[8], 2 * max(1, len(conditioning_var_n_categories)))
    for i, (name, n_cls) in enumerate(conditioning_var_n_categories.items()):
        params["aux"][name] = {
            "w": nrm(aux_keys[2 * i], (n_cls, window_length // 8 * base_channels)),
            "b": nrm(aux_keys[2 * i + 1], (n_cls,)),
        }
    return params


def prepare_kernel_params(params, window_length, input_dim, base_channels,
                          conditioning_var_n_categories, batch):
    """Pack weights once into kernel-ready layouts (done once, not per step)."""
    c1, c2, c3 = base_channels // 4, base_channels // 2, base_channels
    l0 = window_length
    l1, l2, l3 = l0 // 2, l0 // 4, l0 // 8

    def pack_w(w):   # (C_out, C_in, K) -> (C_out, K*C_in): taps folded into K
        c_out, c_in, k = w.shape
        return (jnp.transpose(w, (0, 2, 1))
                .reshape(c_out, k * c_in).astype(jnp.bfloat16))

    def pack_bgb(b, g, bt):   # -> (C_out, 3) f32 (one small operand per layer)
        return jnp.stack([b, g, bt], axis=1).astype(jnp.float32)

    ones1 = jnp.ones((c1,), jnp.float32)
    zeros1 = jnp.zeros((c1,), jnp.float32)

    # Fuse validity + aux head weights along the output dim.
    w_all = [params["fc_w"]]
    b_all = [params["fc_b"]]
    aux_layout = []
    start = 1
    for name, n_cls in conditioning_var_n_categories.items():
        w_all.append(params["aux"][name]["w"])
        b_all.append(params["aux"][name]["b"])
        aux_layout.append((name, start, n_cls))
        start += n_cls
    n_heads = start
    w_all = jnp.concatenate(w_all, axis=0)               # (N_heads, C3*L3)
    b_all = jnp.concatenate(b_all, axis=0)               # (N_heads,)
    # Kernel feature rows are ordered l*C3 + c; PyTorch flatten is c*L3 + l.
    # Fold that permutation into the head weights once:
    wh = jnp.transpose(w_all.reshape(n_heads, c3, l3), (0, 2, 1))
    wh = wh.reshape(n_heads, l3 * c3).astype(jnp.bfloat16)
    bh = b_all.reshape(n_heads, 1).astype(jnp.float32)

    kparams = {
        "w1": pack_w(params["conv1_w"]),
        "w2": pack_w(params["conv2_w"]),
        "w3": pack_w(params["conv3_w"]),
        "bgb1": pack_bgb(params["conv1_b"], ones1, zeros1),
        "bgb2": pack_bgb(params["conv2_b"], params["bn2_g"], params["bn2_b"]),
        "bgb3": pack_bgb(params["conv3_b"], params["bn3_g"], params["bn3_b"]),
        "wh": wh,
        "bh": bh,
    }
    meta = {
        "batch": batch,
        "channels": (input_dim, c1, c2, c3),
        "lengths": (l0, l1, l2, l3),
        "n_heads": n_heads,
        "aux_layout": aux_layout,
        "group_slices": [(s, n) for _, s, n in aux_layout],
    }
    return kparams, meta


# ----------------------------------------------------------------------------
# Pure-JAX reference (same semantics as the PyTorch module, f32)
# ----------------------------------------------------------------------------
def reference_forward(params, x, conditioning_var_n_categories):
    def leaky(v):
        return jnp.where(v > 0, v, NEG_SLOPE * v)

    def conv(h, w, b):
        y = lax.conv_general_dilated(h, w, window_strides=(2,),
                                     padding=[(1, 1)],
                                     dimension_numbers=("NCH", "OIH", "NCH"))
        return y + b[None, :, None]

    def bn(h, g, bta):
        mean = jnp.mean(h, axis=(0, 2), keepdims=True)
        var = jnp.mean((h - mean) ** 2, axis=(0, 2), keepdims=True)
        return ((h - mean) * lax.rsqrt(var + BN_EPS)
                * g[None, :, None] + bta[None, :, None])

    h = jnp.transpose(x, (0, 2, 1)).astype(jnp.float32)
    h = leaky(conv(h, params["conv1_w"], params["conv1_b"]))
    h = leaky(bn(conv(h, params["conv2_w"], params["conv2_b"]),
                 params["bn2_g"], params["bn2_b"]))
    h = leaky(bn(conv(h, params["conv3_w"], params["conv3_b"]),
                 params["bn3_g"], params["bn3_b"]))
    feat = h.reshape(h.shape[0], -1)
    validity = jax.nn.sigmoid(feat @ params["fc_w"].T + params["fc_b"])
    aux = {}
    for name in conditioning_var_n_categories:
        p = params["aux"][name]
        aux[name] = jax.nn.softmax(feat @ p["w"].T + p["b"], axis=1)
    return validity, aux


# ----------------------------------------------------------------------------
# main
# ----------------------------------------------------------------------------
if __name__ == "__main__":
    B = 2
    window_length = 16        # must be divisible by 8
    input_dim = 4
    base_channels = 32
    conditioning_var_n_categories = {"var_a": 5, "var_b": 3}

    key = jax.random.PRNGKey(0)
    pkey, xkey = jax.random.split(key)
    params = init_params(pkey, window_length, input_dim, base_channels,
                         conditioning_var_n_categories)

    # Module input: (B, window_length, input_dim)
    x = jax.random.normal(xkey, (B, window_length, input_dim), dtype=jnp.float32)

    kparams, meta = prepare_kernel_params(params, window_length, input_dim,
                                          base_channels,
                                          conditioning_var_n_categories, B)
    forward = make_forward(kparams, meta)

    validity, aux_outputs = forward(x)
    validity = jax.block_until_ready(validity)
    aux_outputs = {k: jax.block_until_ready(v) for k, v in aux_outputs.items()}

    # Shape / range sanity checks.
    assert validity.shape == (B, 1)
    assert bool(jnp.all((validity >= 0.0) & (validity <= 1.0)))
    for name, n_cls in conditioning_var_n_categories.items():
        assert aux_outputs[name].shape == (B, n_cls)
        assert bool(jnp.allclose(jnp.sum(aux_outputs[name], axis=1), 1.0,
                                 atol=1e-4))

    # Numerical check vs plain-JAX f32 reference (bf16 MXU inputs -> loose tol).
    v_ref, aux_ref = reference_forward(params, x, conditioning_var_n_categories)
    assert bool(jnp.allclose(validity, v_ref, atol=2e-2))
    for name in conditioning_var_n_categories:
        assert bool(jnp.allclose(aux_outputs[name], aux_ref[name], atol=2e-2))

    print("KERNEL_OK")
</pallas_src>

<mosaic_0001>
module attributes {stable_mosaic.version = 11 : i64} {
  func.func @fused_discriminator_kernel(%arg0: memref<4x32xf32, #tpu.memory_space<vmem>>, %arg1: memref<8x16xbf16, #tpu.memory_space<vmem>>, %arg2: memref<16x32xbf16, #tpu.memory_space<vmem>>, %arg3: memref<32x64xbf16, #tpu.memory_space<vmem>>, %arg4: memref<8x3xf32, #tpu.memory_space<vmem>>, %arg5: memref<16x3xf32, #tpu.memory_space<vmem>>, %arg6: memref<32x3xf32, #tpu.memory_space<vmem>>, %arg7: memref<9x64xbf16, #tpu.memory_space<vmem>>, %arg8: memref<9x1xf32, #tpu.memory_space<vmem>>, %arg9: memref<9x2xf32, #tpu.memory_space<vmem>>) attributes {dimension_semantics = [], scalar_prefetch = 0 : i64, scratch_operands = 0 : i64, tpu.core_type = #tpu.core_type<tc>} {
    %c0 = arith.constant 0 : index
    %c0_0 = arith.constant 0 : index
    %0 = vector.load %arg0[%c0, %c0_0] : memref<4x32xf32, #tpu.memory_space<vmem>>, vector<4x32xf32>
    %1 = vector.extract_strided_slice %0 {offsets = [0, 0], sizes = [4, 2], strides = [1, 1]} : vector<4x32xf32> to vector<4x2xf32>
    %2 = vector.extract_strided_slice %0 {offsets = [0, 4], sizes = [4, 2], strides = [1, 1]} : vector<4x32xf32> to vector<4x2xf32>
    %3 = vector.extract_strided_slice %0 {offsets = [0, 8], sizes = [4, 2], strides = [1, 1]} : vector<4x32xf32> to vector<4x2xf32>
    %4 = vector.extract_strided_slice %0 {offsets = [0, 12], sizes = [4, 2], strides = [1, 1]} : vector<4x32xf32> to vector<4x2xf32>
    %5 = vector.extract_strided_slice %0 {offsets = [0, 16], sizes = [4, 2], strides = [1, 1]} : vector<4x32xf32> to vector<4x2xf32>
    %6 = vector.extract_strided_slice %0 {offsets = [0, 20], sizes = [4, 2], strides = [1, 1]} : vector<4x32xf32> to vector<4x2xf32>
    %7 = vector.extract_strided_slice %0 {offsets = [0, 24], sizes = [4, 2], strides = [1, 1]} : vector<4x32xf32> to vector<4x2xf32>
    %8 = vector.extract_strided_slice %0 {offsets = [0, 28], sizes = [4, 2], strides = [1, 1]} : vector<4x32xf32> to vector<4x2xf32>
    %9 = vector.extract_strided_slice %0 {offsets = [0, 2], sizes = [4, 2], strides = [1, 1]} : vector<4x32xf32> to vector<4x2xf32>
    %10 = vector.extract_strided_slice %0 {offsets = [0, 6], sizes = [4, 2], strides = [1, 1]} : vector<4x32xf32> to vector<4x2xf32>
    %11 = vector.extract_strided_slice %0 {offsets = [0, 10], sizes = [4, 2], strides = [1, 1]} : vector<4x32xf32> to vector<4x2xf32>
    %12 = vector.extract_strided_slice %0 {offsets = [0, 14], sizes = [4, 2], strides = [1, 1]} : vector<4x32xf32> to vector<4x2xf32>
    %13 = vector.extract_strided_slice %0 {offsets = [0, 18], sizes = [4, 2], strides = [1, 1]} : vector<4x32xf32> to vector<4x2xf32>
    %14 = vector.extract_strided_slice %0 {offsets = [0, 22], sizes = [4, 2], strides = [1, 1]} : vector<4x32xf32> to vector<4x2xf32>
    %15 = vector.extract_strided_slice %0 {offsets = [0, 26], sizes = [4, 2], strides = [1, 1]} : vector<4x32xf32> to vector<4x2xf32>
    %16 = vector.extract_strided_slice %0 {offsets = [0, 30], sizes = [4, 2], strides = [1, 1]} : vector<4x32xf32> to vector<4x2xf32>
    %17 = tpu.concatenate %1, %2, %3, %4, %5, %6, %7, %8 in 1 : vector<4x2xf32>, vector<4x2xf32>, vector<4x2xf32>, vector<4x2xf32>, vector<4x2xf32>, vector<4x2xf32>, vector<4x2xf32>, vector<4x2xf32> -> vector<4x16xf32>
    %18 = tpu.concatenate %9, %10, %11, %12, %13, %14, %15, %16 in 1 : vector<4x2xf32>, vector<4x2xf32>, vector<4x2xf32>, vector<4x2xf32>, vector<4x2xf32>, vector<4x2xf32>, vector<4x2xf32>, vector<4x2xf32> -> vector<4x16xf32>
    %cst = arith.constant 0.000000e+00 : f32
    %19 = vector.broadcast %cst : f32 to vector<4x2xf32>
    %20 = vector.extract_strided_slice %18 {offsets = [0, 0], sizes = [4, 14], strides = [1, 1]} : vector<4x16xf32> to vector<4x14xf32>
    %21 = tpu.concatenate %19, %20 in 1 : vector<4x2xf32>, vector<4x14xf32> -> vector<4x16xf32>
    %22 = vector.extract_strided_slice %17 {offsets = [0, 2], sizes = [4, 14], strides = [1, 1]} : vector<4x16xf32> to vector<4x14xf32>
    %23 = tpu.concatenate %22, %19 in 1 : vector<4x14xf32>, vector<4x2xf32> -> vector<4x16xf32>
    %24 = tpu.concatenate %21, %17, %18, %23 in 0 : vector<4x16xf32>, vector<4x16xf32>, vector<4x16xf32>, vector<4x16xf32> -> vector<16x16xf32>
    %c0_1 = arith.constant 0 : index
    %c0_2 = arith.constant 0 : index
    %25 = vector.load %arg1[%c0_1, %c0_2] : memref<8x16xbf16, #tpu.memory_space<vmem>>, vector<8x16xbf16>
    %26 = arith.truncf %24 : vector<16x16xf32> to vector<16x16xbf16>
    %cst_3 = arith.constant dense<0.000000e+00> : vector<8x16xf32>
    %27 = tpu.matmul %25, %26, %cst_3 {dimension_numbers = #tpu.dot_dimension_numbers<[1], [0], [0], [1], [0, 0, 1, 1], [], []>} : vector<8x16xbf16>, vector<16x16xbf16>, vector<8x16xf32> -> vector<8x16xf32>
    %c0_4 = arith.constant 0 : index
    %c0_5 = arith.constant 0 : index
    %28 = vector.load %arg4[%c0_4, %c0_5] : memref<8x3xf32, #tpu.memory_space<vmem>>, vector<8x3xf32>
    %29 = vector.extract_strided_slice %28 {offsets = [0, 0], sizes = [8, 1], strides = [1, 1]} : vector<8x3xf32> to vector<8x1xf32>
    %30 = vector.broadcast %29 : vector<8x1xf32> to vector<8x16xf32>
    %31 = arith.addf %27, %30 : vector<8x16xf32>
    %cst_6 = arith.constant 0.000000e+00 : f32
    %32 = vector.broadcast %cst_6 : f32 to vector<8x16xf32>
    %33 = arith.cmpf ogt, %31, %32 : vector<8x16xf32>
    %cst_7 = arith.constant 2.000000e-01 : f32
    %34 = vector.broadcast %cst_7 : f32 to vector<8x16xf32>
    %35 = arith.mulf %34, %31 : vector<8x16xf32>
    %36 = arith.select %33, %31, %35 : vector<8x16xi1>, vector<8x16xf32>
    %37 = vector.extract_strided_slice %36 {offsets = [0, 0], sizes = [8, 2], strides = [1, 1]} : vector<8x16xf32> to vector<8x2xf32>
    %38 = vector.extract_strided_slice %36 {offsets = [0, 4], sizes = [8, 2], strides = [1, 1]} : vector<8x16xf32> to vector<8x2xf32>
    %39 = vector.extract_strided_slice %36 {offsets = [0, 8], sizes = [8, 2], strides = [1, 1]} : vector<8x16xf32> to vector<8x2xf32>
    %40 = vector.extract_strided_slice %36 {offsets = [0, 12], sizes = [8, 2], strides = [1, 1]} : vector<8x16xf32> to vector<8x2xf32>
    %41 = vector.extract_strided_slice %36 {offsets = [0, 2], sizes = [8, 2], strides = [1, 1]} : vector<8x16xf32> to vector<8x2xf32>
    %42 = vector.extract_strided_slice %36 {offsets = [0, 6], sizes = [8, 2], strides = [1, 1]} : vector<8x16xf32> to vector<8x2xf32>
    %43 = vector.extract_strided_slice %36 {offsets = [0, 10], sizes = [8, 2], strides = [1, 1]} : vector<8x16xf32> to vector<8x2xf32>
    %44 = vector.extract_strided_slice %36 {offsets = [0, 14], sizes = [8, 2], strides = [1, 1]} : vector<8x16xf32> to vector<8x2xf32>
    %45 = tpu.concatenate %37, %38, %39, %40 in 1 : vector<8x2xf32>, vector<8x2xf32>, vector<8x2xf32>, vector<8x2xf32> -> vector<8x8xf32>
    %46 = tpu.concatenate %41, %42, %43, %44 in 1 : vector<8x2xf32>, vector<8x2xf32>, vector<8x2xf32>, vector<8x2xf32> -> vector<8x8xf32>
    %cst_8 = arith.constant 0.000000e+00 : f32
    %47 = vector.broadcast %cst_8 : f32 to vector<8x2xf32>
    %48 = vector.extract_strided_slice %46 {offsets = [0, 0], sizes = [8, 6], strides = [1, 1]} : vector<8x8xf32> to vector<8x6xf32>
    %49 = tpu.concatenate %47, %48 in 1 : vector<8x2xf32>, vector<8x6xf32> -> vector<8x8xf32>
    %50 = vector.extract_strided_slice %45 {offsets = [0, 2], sizes = [8, 6], strides = [1, 1]} : vector<8x8xf32> to vector<8x6xf32>
    %51 = tpu.concatenate %50, %47 in 1 : vector<8x6xf32>, vector<8x2xf32> -> vector<8x8xf32>
    %52 = tpu.concatenate %49, %45, %46, %51 in 0 : vector<8x8xf32>, vector<8x8xf32>, vector<8x8xf32>, vector<8x8xf32> -> vector<32x8xf32>
    %c0_9 = arith.constant 0 : index
    %c0_10 = arith.constant 0 : index
    %53 = vector.load %arg2[%c0_9, %c0_10] : memref<16x32xbf16, #tpu.memory_space<vmem>>, vector<16x32xbf16>
    %54 = arith.truncf %52 : vector<32x8xf32> to vector<32x8xbf16>
    %cst_11 = arith.constant dense<0.000000e+00> : vector<16x8xf32>
    %55 = tpu.matmul %53, %54, %cst_11 {dimension_numbers = #tpu.dot_dimension_numbers<[1], [0], [0], [1], [0, 0, 1, 1], [], []>} : vector<16x32xbf16>, vector<32x8xbf16>, vector<16x8xf32> -> vector<16x8xf32>
    %c0_12 = arith.constant 0 : index
    %c0_13 = arith.constant 0 : index
    %56 = vector.load %arg5[%c0_12, %c0_13] : memref<16x3xf32, #tpu.memory_space<vmem>>, vector<16x3xf32>
    %57 = vector.extract_strided_slice %56 {offsets = [0, 0], sizes = [16, 1], strides = [1, 1]} : vector<16x3xf32> to vector<16x1xf32>
    %58 = vector.broadcast %57 : vector<16x1xf32> to vector<16x8xf32>
    %59 = arith.addf %55, %58 : vector<16x8xf32>
    %cst_14 = arith.constant dense<0.000000e+00> : vector<16xf32>
    %60 = vector.multi_reduction <add>, %59, %cst_14 [1] : vector<16x8xf32> to vector<16xf32>
    %61 = vector.shape_cast %60 : vector<16xf32> to vector<16x1xf32>
    %cst_15 = arith.constant 1.250000e-01 : f32
    %62 = vector.broadcast %cst_15 : f32 to vector<16x1xf32>
    %63 = arith.mulf %61, %62 : vector<16x1xf32>
    %64 = arith.mulf %59, %59 : vector<16x8xf32>
    %cst_16 = arith.constant dense<0.000000e+00> : vector<16xf32>
    %65 = vector.multi_reduction <add>, %64, %cst_16 [1] : vector<16x8xf32> to vector<16xf32>
    %66 = vector.shape_cast %65 : vector<16xf32> to vector<16x1xf32>
    %cst_17 = arith.constant 1.250000e-01 : f32
    %67 = vector.broadcast %cst_17 : f32 to vector<16x1xf32>
    %68 = arith.mulf %66, %67 : vector<16x1xf32>
    %69 = arith.mulf %63, %63 : vector<16x1xf32>
    %70 = arith.subf %68, %69 : vector<16x1xf32>
    %cst_18 = arith.constant 0.000000e+00 : f32
    %71 = vector.broadcast %cst_18 : f32 to vector<16x1xf32>
    %72 = arith.maximumf %70, %71 : vector<16x1xf32>
    %73 = vector.broadcast %63 : vector<16x1xf32> to vector<16x8xf32>
    %74 = arith.subf %59, %73 : vector<16x8xf32>
    %cst_19 = arith.constant 9.99999974E-6 : f32
    %75 = vector.broadcast %cst_19 : f32 to vector<16x1xf32>
    %76 = arith.addf %72, %75 : vector<16x1xf32>
    %77 = math.rsqrt %76 : vector<16x1xf32>
    %78 = vector.broadcast %77 : vector<16x1xf32> to vector<16x8xf32>
    %79 = arith.mulf %74, %78 : vector<16x8xf32>
    %80 = vector.extract_strided_slice %56 {offsets = [0, 1], sizes = [16, 1], strides = [1, 1]} : vector<16x3xf32> to vector<16x1xf32>
    %81 = vector.broadcast %80 : vector<16x1xf32> to vector<16x8xf32>
    %82 = arith.mulf %79, %81 : vector<16x8xf32>
    %83 = vector.extract_strided_slice %56 {offsets = [0, 2], sizes = [16, 1], strides = [1, 1]} : vector<16x3xf32> to vector<16x1xf32>
    %84 = vector.broadcast %83 : vector<16x1xf32> to vector<16x8xf32>
    %85 = arith.addf %82, %84 : vector<16x8xf32>
    %cst_20 = arith.constant 0.000000e+00 : f32
    %86 = vector.broadcast %cst_20 : f32 to vector<16x8xf32>
    %87 = arith.cmpf ogt, %85, %86 : vector<16x8xf32>
    %cst_21 = arith.constant 2.000000e-01 : f32
    %88 = vector.broadcast %cst_21 : f32 to vector<16x8xf32>
    %89 = arith.mulf %88, %85 : vector<16x8xf32>
    %90 = arith.select %87, %85, %89 : vector<16x8xi1>, vector<16x8xf32>
    %91 = vector.extract_strided_slice %90 {offsets = [0, 0], sizes = [16, 2], strides = [1, 1]} : vector<16x8xf32> to vector<16x2xf32>
    %92 = vector.extract_strided_slice %90 {offsets = [0, 4], sizes = [16, 2], strides = [1, 1]} : vector<16x8xf32> to vector<16x2xf32>
    %93 = vector.extract_strided_slice %90 {offsets = [0, 2], sizes = [16, 2], strides = [1, 1]} : vector<16x8xf32> to vector<16x2xf32>
    %94 = vector.extract_strided_slice %90 {offsets = [0, 6], sizes = [16, 2], strides = [1, 1]} : vector<16x8xf32> to vector<16x2xf32>
    %95 = tpu.concatenate %91, %92 in 1 : vector<16x2xf32>, vector<16x2xf32> -> vector<16x4xf32>
    %96 = tpu.concatenate %93, %94 in 1 : vector<16x2xf32>, vector<16x2xf32> -> vector<16x4xf32>
    %cst_22 = arith.constant 0.000000e+00 : f32
    %97 = vector.broadcast %cst_22 : f32 to vector<16x2xf32>
    %98 = vector.extract_strided_slice %96 {offsets = [0, 0], sizes = [16, 2], strides = [1, 1]} : vector<16x4xf32> to vector<16x2xf32>
    %99 = tpu.concatenate %97, %98 in 1 : vector<16x2xf32>, vector<16x2xf32> -> vector<16x4xf32>
    %100 = vector.extract_strided_slice %95 {offsets = [0, 2], sizes = [16, 2], strides = [1, 1]} : vector<16x4xf32> to vector<16x2xf32>
    %101 = tpu.concatenate %100, %97 in 1 : vector<16x2xf32>, vector<16x2xf32> -> vector<16x4xf32>
    %102 = tpu.concatenate %99, %95, %96, %101 in 0 : vector<16x4xf32>, vector<16x4xf32>, vector<16x4xf32>, vector<16x4xf32> -> vector<64x4xf32>
    %c0_23 = arith.constant 0 : index
    %c0_24 = arith.constant 0 : index
    %103 = vector.load %arg3[%c0_23, %c0_24] : memref<32x64xbf16, #tpu.memory_space<vmem>>, vector<32x64xbf16>
    %104 = arith.truncf %102 : vector<64x4xf32> to vector<64x4xbf16>
    %cst_25 = arith.constant dense<0.000000e+00> : vector<32x4xf32>
    %105 = tpu.matmul %103, %104, %cst_25 {dimension_numbers = #tpu.dot_dimension_numbers<[1], [0], [0], [1], [0, 0, 1, 1], [], []>} : vector<32x64xbf16>, vector<64x4xbf16>, vector<32x4xf32> -> vector<32x4xf32>
    %c0_26 = arith.constant 0 : index
    %c0_27 = arith.constant 0 : index
    %106 = vector.load %arg6[%c0_26, %c0_27] : memref<32x3xf32, #tpu.memory_space<vmem>>, vector<32x3xf32>
    %107 = vector.extract_strided_slice %106 {offsets = [0, 0], sizes = [32, 1], strides = [1, 1]} : vector<32x3xf32> to vector<32x1xf32>
    %108 = vector.broadcast %107 : vector<32x1xf32> to vector<32x4xf32>
    %109 = arith.addf %105, %108 : vector<32x4xf32>
    %cst_28 = arith.constant dense<0.000000e+00> : vector<32xf32>
    %110 = vector.multi_reduction <add>, %109, %cst_28 [1] : vector<32x4xf32> to vector<32xf32>
    %111 = vector.shape_cast %110 : vector<32xf32> to vector<32x1xf32>
    %cst_29 = arith.constant 2.500000e-01 : f32
    %112 = vector.broadcast %cst_29 : f32 to vector<32x1xf32>
    %113 = arith.mulf %111, %112 : vector<32x1xf32>
    %114 = arith.mulf %109, %109 : vector<32x4xf32>
    %cst_30 = arith.constant dense<0.000000e+00> : vector<32xf32>
    %115 = vector.multi_reduction <add>, %114, %cst_30 [1] : vector<32x4xf32> to vector<32xf32>
    %116 = vector.shape_cast %115 : vector<32xf32> to vector<32x1xf32>
    %cst_31 = arith.constant 2.500000e-01 : f32
    %117 = vector.broadcast %cst_31 : f32 to vector<32x1xf32>
    %118 = arith.mulf %116, %117 : vector<32x1xf32>
    %119 = arith.mulf %113, %113 : vector<32x1xf32>
    %120 = arith.subf %118, %119 : vector<32x1xf32>
    %cst_32 = arith.constant 0.000000e+00 : f32
    %121 = vector.broadcast %cst_32 : f32 to vector<32x1xf32>
    %122 = arith.maximumf %120, %121 : vector<32x1xf32>
    %123 = vector.broadcast %113 : vector<32x1xf32> to vector<32x4xf32>
    %124 = arith.subf %109, %123 : vector<32x4xf32>
    %cst_33 = arith.constant 9.99999974E-6 : f32
    %125 = vector.broadcast %cst_33 : f32 to vector<32x1xf32>
    %126 = arith.addf %122, %125 : vector<32x1xf32>
    %127 = math.rsqrt %126 : vector<32x1xf32>
    %128 = vector.broadcast %127 : vector<32x1xf32> to vector<32x4xf32>
    %129 = arith.mulf %124, %128 : vector<32x4xf32>
    %130 = vector.extract_strided_slice %106 {offsets = [0, 1], sizes = [32, 1], strides = [1, 1]} : vector<32x3xf32> to vector<32x1xf32>
    %131 = vector.broadcast %130 : vector<32x1xf32> to vector<32x4xf32>
    %132 = arith.mulf %129, %131 : vector<32x4xf32>
    %133 = vector.extract_strided_slice %106 {offsets = [0, 2], sizes = [32, 1], strides = [1, 1]} : vector<32x3xf32> to vector<32x1xf32>
    %134 = vector.broadcast %133 : vector<32x1xf32> to vector<32x4xf32>
    %135 = arith.addf %132, %134 : vector<32x4xf32>
    %cst_34 = arith.constant 0.000000e+00 : f32
    %136 = vector.broadcast %cst_34 : f32 to vector<32x4xf32>
    %137 = arith.cmpf ogt, %135, %136 : vector<32x4xf32>
    %cst_35 = arith.constant 2.000000e-01 : f32
    %138 = vector.broadcast %cst_35 : f32 to vector<32x4xf32>
    %139 = arith.mulf %138, %135 : vector<32x4xf32>
    %140 = arith.select %137, %135, %139 : vector<32x4xi1>, vector<32x4xf32>
    %141 = vector.extract_strided_slice %140 {offsets = [0, 0], sizes = [32, 2], strides = [1, 1]} : vector<32x4xf32> to vector<32x2xf32>
    %142 = vector.extract_strided_slice %140 {offsets = [0, 2], sizes = [32, 2], strides = [1, 1]} : vector<32x4xf32> to vector<32x2xf32>
    %143 = tpu.concatenate %141, %142 in 0 : vector<32x2xf32>, vector<32x2xf32> -> vector<64x2xf32>
    %c0_36 = arith.constant 0 : index
    %c0_37 = arith.constant 0 : index
    %144 = vector.load %arg7[%c0_36, %c0_37] : memref<9x64xbf16, #tpu.memory_space<vmem>>, vector<9x64xbf16>
    %145 = arith.truncf %143 : vector<64x2xf32> to vector<64x2xbf16>
    %cst_38 = arith.constant dense<0.000000e+00> : vector<9x2xf32>
    %146 = tpu.matmul %144, %145, %cst_38 {dimension_numbers = #tpu.dot_dimension_numbers<[1], [0], [0], [1], [0, 0, 1, 1], [], []>} : vector<9x64xbf16>, vector<64x2xbf16>, vector<9x2xf32> -> vector<9x2xf32>
    %c0_39 = arith.constant 0 : index
    %c0_40 = arith.constant 0 : index
    %147 = vector.load %arg8[%c0_39, %c0_40] : memref<9x1xf32, #tpu.memory_space<vmem>>, vector<9x1xf32>
    %148 = vector.broadcast %147 : vector<9x1xf32> to vector<9x2xf32>
    %149 = arith.addf %146, %148 : vector<9x2xf32>
    %150 = vector.extract_strided_slice %149 {offsets = [0, 0], sizes = [1, 2], strides = [1, 1]} : vector<9x2xf32> to vector<1x2xf32>
    %cst_41 = arith.constant 0.000000e+00 : f32
    %151 = vector.broadcast %cst_41 : f32 to vector<1x2xf32>
    %152 = arith.subf %151, %150 : vector<1x2xf32>
    %153 = math.exp %152 : vector<1x2xf32>
    %cst_42 = arith.constant 1.000000e+00 : f32
    %154 = vector.broadcast %cst_42 : f32 to vector<1x2xf32>
    %155 = arith.addf %154, %153 : vector<1x2xf32>
    %cst_43 = arith.constant 1.000000e+00 : f32
    %156 = vector.broadcast %cst_43 : f32 to vector<1x2xf32>
    %157 = arith.divf %156, %155 : vector<1x2xf32>
    %158 = vector.extract_strided_slice %149 {offsets = [1, 0], sizes = [5, 2], strides = [1, 1]} : vector<9x2xf32> to vector<5x2xf32>
    %cst_44 = arith.constant dense<0xFF800000> : vector<2xf32>
    %159 = vector.multi_reduction <maximumf>, %158, %cst_44 [0] : vector<5x2xf32> to vector<2xf32>
    %160 = vector.shape_cast %159 : vector<2xf32> to vector<1x2xf32>
    %161 = vector.broadcast %160 : vector<1x2xf32> to vector<5x2xf32>
    %162 = arith.subf %158, %161 : vector<5x2xf32>
    %163 = math.exp %162 : vector<5x2xf32>
    %cst_45 = arith.constant dense<0.000000e+00> : vector<2xf32>
    %164 = vector.multi_reduction <add>, %163, %cst_45 [0] : vector<5x2xf32> to vector<2xf32>
    %165 = vector.shape_cast %164 : vector<2xf32> to vector<1x2xf32>
    %166 = vector.broadcast %165 : vector<1x2xf32> to vector<5x2xf32>
    %167 = arith.divf %163, %166 : vector<5x2xf32>
    %168 = vector.extract_strided_slice %149 {offsets = [6, 0], sizes = [3, 2], strides = [1, 1]} : vector<9x2xf32> to vector<3x2xf32>
    %cst_46 = arith.constant dense<0xFF800000> : vector<2xf32>
    %169 = vector.multi_reduction <maximumf>, %168, %cst_46 [0] : vector<3x2xf32> to vector<2xf32>
    %170 = vector.shape_cast %169 : vector<2xf32> to vector<1x2xf32>
    %171 = vector.broadcast %170 : vector<1x2xf32> to vector<3x2xf32>
    %172 = arith.subf %168, %171 : vector<3x2xf32>
    %173 = math.exp %172 : vector<3x2xf32>
    %cst_47 = arith.constant dense<0.000000e+00> : vector<2xf32>
    %174 = vector.multi_reduction <add>, %173, %cst_47 [0] : vector<3x2xf32> to vector<2xf32>
    %175 = vector.shape_cast %174 : vector<2xf32> to vector<1x2xf32>
    %176 = vector.broadcast %175 : vector<1x2xf32> to vector<3x2xf32>
    %177 = arith.divf %173, %176 : vector<3x2xf32>
    %178 = tpu.concatenate %157, %167, %177 in 0 : vector<1x2xf32>, vector<5x2xf32>, vector<3x2xf32> -> vector<9x2xf32>
    %c0_48 = arith.constant 0 : index
    %c0_49 = arith.constant 0 : index
    %179 = vector.load %arg9[%c0_48, %c0_49] : memref<9x2xf32, #tpu.memory_space<vmem>>, vector<9x2xf32>
    tpu.vector_store %arg9[%c0_48, %c0_49], %178 {strides = array<i32>} : memref<9x2xf32, #tpu.memory_space<vmem>>, vector<9x2xf32>,
    return
  }
}

</mosaic_0001>

<llo_original>
// kernel: forward.1
$region0: #{forward.1}
  #allocation0 [shape = 'u32[]', space=smem, size = 0x4, offset = 0x4, fixed_abs, tag = 'smem constant byte address 0x4 - core index']
  #allocation1 [shape = 'u32[144,128]{1,0:T(1,128)}', space=vmem, size = 0x12000, scoped, tag = 'internal scratch']
  %s0 = inlined_call_operand.vmem [shape: f32[4,32], index: 0, kind: input, shape index: {}]
  %s1 = inlined_call_operand.hbm [shape: bf16[8,16], index: 1, kind: input, shape index: {}]
  %s2 = inlined_call_operand.hbm [shape: bf16[16,32], index: 2, kind: input, shape index: {}]
  %s3 = inlined_call_operand.vmem [shape: bf16[32,64], index: 3, kind: input, shape index: {}]
  %s4 = inlined_call_operand.hbm [shape: f32[8,3], index: 4, kind: input, shape index: {}]
  %s5 = inlined_call_operand.vmem [shape: f32[16,3], index: 5, kind: input, shape index: {}]
  %s6 = inlined_call_operand.vmem [shape: f32[32,3], index: 6, kind: input, shape index: {}]
  %s7 = inlined_call_operand.vmem [shape: bf16[9,64], index: 7, kind: input, shape index: {}]
  %s8 = inlined_call_operand.vmem [shape: f32[9,1], index: 8, kind: input, shape index: {}]
  %s9 = inlined_call_operand.vmem [shape: f32[9,2], index: 9, kind: output, shape index: {}]
  %s10 = sld [smem:[#allocation0]]
  $region58: #{forward.1} parent=0
    _
  %s12 = ssub.s32 1, %s10
  %s13 = scalar_select 0, %s12, %s10
  $region1: #{forward.1} parent=0
    #allocation2 [shape = 'u8[2048]{0}', space=vmem, size = 0x800, scoped, tag = 'input window, operand 1, single buffered']
    #allocation3 [shape = 's32[1]{0}', space=sflag, size = 0x4, scoped, tag = 'scoped memory for forward.1']
    #allocation4 [shape = 'u8[4096]{0}', space=vmem, size = 0x1000, scoped, tag = 'input window, operand 2, single buffered']
    #allocation5 [shape = 's32[1]{0}', space=sflag, size = 0x4, scoped, tag = 'scoped memory for forward.1']
    #allocation6 [shape = 'u8[4096]{0}', space=vmem, size = 0x1000, scoped, tag = 'input window, operand 4, single buffered']
    %14 = vsyncpa [#allocation3], 0
    %15 = vsyncpa [#allocation5], 0
    // Predicated region
    $region2: #{forward.1} parent=1 // pred_check
      _
    $region3: #{forward.1} parent=1 // pred_check_branch
      %17 = sbr.rel (0) target = $region5
    $region4: #{forward.1} parent=1 // pred_region
      _
    $region5: #{forward.1} parent=1 // pred_fallthru
      _
    // Predicated region
    $region6: #{forward.1} parent=1 // pred_check
      _
    $region7: #{forward.1} parent=1 // pred_check_branch
      %19 = sbr.rel (0) target = $region9
    $region8: #{forward.1} parent=1 // pred_region
      %s21 = ssub.s32 64, 64
      %22 = vsyncadd [#allocation3], %s21
      %s24 = sshll.u32 [#allocation2], 4
      %s25 = int_to_ptr.vmem [resolvable:$true] %s24
      %27 = dma.hbm_to_vmem [thread:$0]  %s1, 64, %s25, [#allocation3]
    $region9: #{forward.1} parent=1 // pred_fallthru
      _
    // Predicated region
    $region10: #{forward.1} parent=1 // pred_check
      _
    $region11: #{forward.1} parent=1 // pred_check_branch
      %29 = sbr.rel (0) target = $region13
    $region12: #{forward.1} parent=1 // pred_region
      %s31 = ssub.s32 128, 128
      %32 = vsyncadd [#allocation5], %s31
      %s33 = sshll.u32 [#allocation4], 4
      %s34 = int_to_ptr.vmem [resolvable:$true] %s33
      %39 = dma.hbm_to_vmem [thread:$0]  %s2, 128, %s34, [#allocation5], 64, 64, 4
    $region13: #{forward.1} parent=1 // pred_fallthru
      _
    // Predicated region
    $region14: #{forward.1} parent=1 // pred_check
      _
    $region15: #{forward.1} parent=1 // pred_check_branch
      %41 = sbr.rel (0) target = $region17
    $region16: #{forward.1} parent=1 // pred_region
      _
    $region17: #{forward.1} parent=1 // pred_fallthru
      _
    // Predicated region
    $region18: #{forward.1} parent=1 // pred_check
      _
    $region19: #{forward.1} parent=1 // pred_check_branch
      %43 = sbr.rel (0) target = $region21
    $region20: #{forward.1} parent=1 // pred_region
      %s45 = ssub.s32 128, 128
      %46 = vsyncadd [#allocation5], %s45
      %s48 = sshll.u32 [#allocation6], 4
      %s49 = int_to_ptr.vmem [resolvable:$true] %s48
      %51 = dma.hbm_to_vmem [thread:$0]  %s4, 128, %s49, [#allocation5]
    $region21: #{forward.1} parent=1 // pred_fallthru
      _
    // Predicated region
    $region22: #{forward.1} parent=1 // pred_check
      _
    $region23: #{forward.1} parent=1 // pred_check_branch
      %53 = sbr.rel (0) target = $region25
    $region24: #{forward.1} parent=1 // pred_region
      _
    $region25: #{forward.1} parent=1 // pred_fallthru
      _
    // Predicated region
    $region26: #{forward.1} parent=1 // pred_check
      _
    $region27: #{forward.1} parent=1 // pred_check_branch
      %55 = sbr.rel (0) target = $region29
    $region28: #{forward.1} parent=1 // pred_region
      _
    $region29: #{forward.1} parent=1 // pred_fallthru
      _
    // Predicated region
    $region30: #{forward.1} parent=1 // pred_check
      _
    $region31: #{forward.1} parent=1 // pred_check_branch
      %57 = sbr.rel (0) target = $region33
    $region32: #{forward.1} parent=1 // pred_region
      _
    $region33: #{forward.1} parent=1 // pred_fallthru
      _
    // Predicated region
    $region34: #{forward.1} parent=1 // pred_check
      _
    $region35: #{forward.1} parent=1 // pred_check_branch
      %59 = sbr.rel (0) target = $region37
    $region36: #{forward.1} parent=1 // pred_region
      _
    $region37: #{forward.1} parent=1 // pred_fallthru
      _
    // Predicated region
    $region38: #{forward.1} parent=1 // pred_check
      _
    $region39: #{forward.1} parent=1 // pred_check_branch
      %61 = sbr.rel (0) target = $region41
    $region40: #{forward.1} parent=1 // pred_region
      %62 = dma.done [#allocation3], 64
    $region41: #{forward.1} parent=1 // pred_fallthru
      _
    // Predicated region
    $region42: #{forward.1} parent=1 // pred_check
      _
    $region43: #{forward.1} parent=1 // pred_check_branch
      %64 = sbr.rel (0) target = $region45
    $region44: #{forward.1} parent=1 // pred_region
      %65 = dma.done [#allocation5], 128
    $region45: #{forward.1} parent=1 // pred_fallthru
      _
    // Predicated region
    $region46: #{forward.1} parent=1 // pred_check
      _
    $region47: #{forward.1} parent=1 // pred_check_branch
      %67 = sbr.rel (0) target = $region49
    $region48: #{forward.1} parent=1 // pred_region
      %68 = dma.done [#allocation5], 128
    $region49: #{forward.1} parent=1 // pred_fallthru
      _
    %v70 = vld [vmem:[%s0] sm:$0xf]
    %72 = vrot.lane.b32.xlu0 %v70, 126
    %v73 = vpop.permute.xlu0 %72
    %75 = vrot.lane.b32.xlu0 %v70, 124
    %v76 = vpop.permute.xlu0 %75
    %78 = vrot.lane.b32.xlu0 %v70, 122
    %v79 = vpop.permute.xlu0 %78
    %81 = vrot.lane.b32.xlu0 %v70, 120
    %v82 = vpop.permute.xlu0 %81
    %84 = vrot.lane.b32.xlu0 %v70, 118
    %v85 = vpop.permute.xlu0 %84
    %87 = vrot.lane.b32.xlu0 %v70, 116
    %v88 = vpop.permute.xlu0 %87
    %90 = vrot.lane.b32.xlu0 %v70, 114
    %v91 = vpop.permute.xlu0 %90
    %vm93 = vcmask 15360
    %v94 = vsel %vm93, %v70, %v73
    %vm95 = vcmask 31744
    %v96 = vsel %vm95, %v94, %v76
    %vm97 = vcmask 48128
    %v98 = vsel %vm97, %v96, %v79
    %vm99 = vcmask 64512
    %v100 = vsel %vm99, %v98, %v82
    %vm101 = vcmask 80896
    %v102 = vsel %vm101, %v100, %v85
    %vm103 = vcmask 97280
    %v104 = vsel %vm103, %v102, %v88
    %vm105 = vcmask 113664
    %v106 = vsel %vm105, %v104, %v91
    %107 = vrot.lane.b32.xlu0 %v70, 112
    %v108 = vpop.permute.xlu0 %107
    %v110 = vsel %vm93, %v73, %v76
    %v111 = vsel %vm95, %v110, %v79
    %v112 = vsel %vm97, %v111, %v82
    %v113 = vsel %vm99, %v112, %v85
    %v114 = vsel %vm101, %v113, %v88
    %v115 = vsel %vm103, %v114, %v91
    %v116 = vsel %vm105, %v115, %v108
    %118 = vrot.lane.b32.xlu0 %v116, 2
    %v119 = vpop.permute.xlu0 %118
    %v121 = vsel %vm93, 0.0, %v119
    %123 = vrot.lane.b32.xlu0 %v106, 126
    %v124 = vpop.permute.xlu0 %123
    %v126 = vsel %vm105, %v124, 0.0
    %v127 = vrot.slane %v106, 4
    %v130 = vrot.slane %v126, 4
    %vm132 = vcmask 1043456
    %v133 = vsel %vm132, %v121, %v127
    %v134 = vsel %vm132, %v116, %v130
    %v135 = vld [vmem:[#allocation2] sm:$0xf]
    %v136 = vpack.c.bf16 %v134, %v133
    %v137 = vld [vmem:[#allocation6] sm:$0xff]
    %139 = vset.pattern.permute.xlu0 0
    %140 = vperm.xlu0 %139, %v137
    %v141 = vpop.permute.xlu0 %140
    %vm143 = vcmask 130048
    %v145 = vsel %vm143, %v135, 0
    %147 = vmatprep.subr.bf16.mxu0 0
    %148 = vmatpush1.bf16.msra.mxu0 0
    %149 = vmatprep.subr.bf16.mxu0 0
    %150 = vmatpush1.bf16.msra.mxu0 0
    %151 = vmatprep.subr.bf16.mxu0 0
    %152 = vmatpush1.bf16.msra.mxu0 0
    %153 = vmatprep.subr.bf16.mxu0 0
    %154 = vmatpush1.bf16.msra.mxu0 0
    %155 = vmatprep.subr.bf16.mxu0 0
    %156 = vmatpush1.bf16.msra.mxu0 0
    %157 = vmatprep.subr.bf16.mxu0 0
    %158 = vmatpush1.bf16.msra.mxu0 0
    %159 = vmatprep.subr.bf16.mxu0 0
    %160 = vmatpush1.bf16.msra.mxu0 0
    %161 = vmatprep.subr.bf16.mxu0 0
    %162 = vmatpush1.bf16.msra.mxu0 %v136
    %163 = vmatprep.subr.bf16.mxu0 0
    %164 = vmatpush2.bf16.msra.mxu0 0
    %165 = vmatprep.subr.bf16.mxu0 0
    %166 = vmatpush2.bf16.msra.mxu0 0
    %167 = vmatprep.subr.bf16.mxu0 0
    %168 = vmatpush2.bf16.msra.mxu0 0
    %169 = vmatprep.subr.bf16.mxu0 0
    %170 = vmatpush2.bf16.msra.mxu0 0
    %171 = vmatprep.subr.bf16.mxu0 0
    %172 = vmatpush2.bf16.msra.mxu0 0
    %173 = vmatprep.subr.bf16.mxu0 0
    %174 = vmatpush2.bf16.msra.mxu0 0
    %175 = vmatprep.subr.bf16.mxu0 0
    %176 = vmatpush2.bf16.msra.mxu0 0
    %177 = vmatprep.subr.bf16.mxu0 0
    %178 = vmatpush2.bf16.msra.mxu0 0
    %179 = vmatprep.mubr.bf16.mxu0 0
    %180 = vmatmul.mubr.bf16.gmra.mxu0 %v145
    %v181 = vpop.f32.mrf.mxu0
    %v182 = vadd.f32 %v141, %v181
    %v183 = vpop.f32.mrf.mxu0
    %v184 = vpop.f32.mrf.mxu0
    %v185 = vpop.f32.mrf.mxu0
    %186 = vdwg.mxu0
    %vm187 = vcmp.gt.f32.partialorder %v182, 0.0
    %v188 = vmul.f32 %v182, 0.2
    %v189 = vsel %vm187, %v182, %v188
    %191 = vrot.lane.b32.xlu0 %v189, 126
    %v192 = vpop.permute.xlu0 %191
    %194 = vrot.lane.b32.xlu0 %v189, 124
    %v195 = vpop.permute.xlu0 %194
    %197 = vrot.lane.b32.xlu0 %v189, 122
    %v198 = vpop.permute.xlu0 %197
    %v200 = vsel %vm93, %v189, %v192
    %v201 = vsel %vm95, %v200, %v195
    %v202 = vsel %vm97, %v201, %v198
    %203 = vrot.lane.b32.xlu0 %v189, 120
    %v204 = vpop.permute.xlu0 %203
    %v206 = vsel %vm93, %v192, %v195
    %v207 = vsel %vm95, %v206, %v198
    %v208 = vsel %vm97, %v207, %v204
    %210 = vrot.lane.b32.xlu0 %v208, 2
    %v211 = vpop.permute.xlu0 %210
    %v213 = vsel %vm93, 0.0, %v211
    %215 = vrot.lane.b32.xlu0 %v202, 126
    %v216 = vpop.permute.xlu0 %215
    %v218 = vsel %vm97, %v216, 0.0
    %v219 = vld [vmem:[#allocation4] sm:$0xf]
    %v220 = vld [vmem:[#allocation4 + $0x4] sm:$0xf]
    %v221 = vpack.c.bf16 %v202, %v213
    %v222 = vpack.c.bf16 %v218, %v208
    %v223 = vld [vmem:[%s5] sm:$0xff]
    %v224 = vld [vmem:[%s5 + $0x8] sm:$0xff]
    %226 = vset.pattern.permute.xlu0 0
    %227 = vperm.xlu0 %226, %v223
    %v228 = vpop.permute.xlu0 %227
    %231 = vset.pattern.permute.xlu0 0
    %232 = vperm.xlu0 %231, %v224
    %v233 = vpop.permute.xlu0 %232
    %v237 = vunpack.c.l.b16 %v219
    %v238 = vunpack.c.l.b16 %v220
    %v239 = vpack.c.b16 %v238, %v237
    %vm240 = vcmask 261120
    %v242 = vsel %vm240, %v239, 0
    %244 = vmatprep.subr.bf16.mxu0 0
    %245 = vmatpush1.bf16.msra.mxu0 0
    %246 = vmatprep.subr.bf16.mxu0 0
    %247 = vmatpush1.bf16.msra.mxu0 0
    %248 = vmatprep.subr.bf16.mxu0 0
    %249 = vmatpush1.bf16.msra.mxu0 0
    %250 = vmatprep.subr.bf16.mxu0 0
    %251 = vmatpush1.bf16.msra.mxu0 0
    %252 = vmatprep.subr.bf16.mxu0 0
    %253 = vmatpush1.bf16.msra.mxu0 0
    %254 = vmatprep.subr.bf16.mxu0 0
    %255 = vmatpush1.bf16.msra.mxu0 0
    %256 = vmatprep.subr.bf16.mxu0 0
    %257 = vmatpush1.bf16.msra.mxu0 %v222
    %258 = vmatprep.subr.bf16.mxu0 0
    %259 = vmatpush1.bf16.msra.mxu0 %v221
    %260 = vmatprep.subr.bf16.mxu0 0
    %261 = vmatpush2.bf16.msra.mxu0 0
    %262 = vmatprep.subr.bf16.mxu0 0
    %263 = vmatpush2.bf16.msra.mxu0 0
    %264 = vmatprep.subr.bf16.mxu0 0
    %265 = vmatpush2.bf16.msra.mxu0 0
    %266 = vmatprep.subr.bf16.mxu0 0
    %267 = vmatpush2.bf16.msra.mxu0 0
    %268 = vmatprep.subr.bf16.mxu0 0
    %269 = vmatpush2.bf16.msra.mxu0 0
    %270 = vmatprep.subr.bf16.mxu0 0
    %271 = vmatpush2.bf16.msra.mxu0 0
    %272 = vmatprep.subr.bf16.mxu0 0
    %273 = vmatpush2.bf16.msra.mxu0 0
    %274 = vmatprep.subr.bf16.mxu0 0
    %275 = vmatpush2.bf16.msra.mxu0 0
    %276 = vmatprep.mubr.bf16.mxu0 0
    %277 = vmatmul.mubr.bf16.gmra.mxu0 %v242
    %v278 = vpop.f32.mrf.mxu0
    %v279 = vadd.f32 %v228, %v278
    %v280 = vpop.f32.mrf.mxu0
    %v281 = vpop.f32.mrf.mxu0
    %v282 = vadd.f32 %v233, %v281
    %v283 = vpop.f32.mrf.mxu0
    %284 = vdwg.mxu0
    %v285 = vsel %vm99, %v279, 0.0
    %286 = vadd.xlane.f32.xlu0 %v285
    %v287 = vpop.xlane.xlu0 %286
    %v288 = vsel %vm99, %v282, 0.0
    %289 = vadd.xlane.f32.xlu0 %v288
    %v290 = vpop.xlane.xlu0 %289
    %v291 = vmul.f32 %v287, 0.125
    %v292 = vmul.f32 %v290, 0.125
    %v293 = vmul.f32 %v279, %v279
    %v294 = vmul.f32 %v282, %v282
    %v295 = vsel %vm99, %v293, 0.0
    %296 = vadd.xlane.f32.xlu0 %v295
    %v297 = vpop.xlane.xlu0 %296
    %v298 = vsel %vm99, %v294, 0.0
    %299 = vadd.xlane.f32.xlu0 %v298
    %v300 = vpop.xlane.xlu0 %299
    %v301 = vmul.f32 %v297, 0.125
    %v302 = vmul.f32 %v300, 0.125
    %v303 = vmul.f32 %v291, %v291
    %v304 = vmul.f32 %v292, %v292
    %v305 = vsub.f32 %v301, %v303
    %v306 = vsub.f32 %v302, %v304
    %v307 = vmax.f32 %v305, 0.0
    %v308 = vmax.f32 %v306, 0.0
    %v309 = vsub.f32 %v279, %v291
    %v310 = vsub.f32 %v282, %v292
    %v311 = vadd.f32 %v307, 1e-05
    %v312 = vadd.f32 %v308, 1e-05
    %v313 = vrsqrt.pop %v311
    %v314 = vrsqrt.pop %v312
    %v315 = vmul.f32 %v309, %v313
    %v316 = vmul.f32 %v310, %v314
    %317 = vset.pattern.permute.xlu0 1
    %318 = vperm.xlu0 %317, %v223
    %v319 = vpop.permute.xlu0 %318
    %321 = vset.pattern.permute.xlu0 1
    %322 = vperm.xlu0 %321, %v224
    %v323 = vpop.permute.xlu0 %322
    %v325 = vmul.f32 %v315, %v319
    %v326 = vmul.f32 %v316, %v323
    %327 = vset.pattern.permute.xlu0 2
    %328 = vperm.xlu0 %327, %v223
    %v329 = vpop.permute.xlu0 %328
    %331 = vset.pattern.permute.xlu0 2
    %332 = vperm.xlu0 %331, %v224
    %v333 = vpop.permute.xlu0 %332
    %v335 = vadd.f32 %v325, %v329
    %v336 = vadd.f32 %v326, %v333
    %vm337 = vcmp.gt.f32.partialorder %v335, 0.0
    %vm338 = vcmp.gt.f32.partialorder %v336, 0.0
    %v339 = vmul.f32 %v335, 0.2
    %v340 = vmul.f32 %v336, 0.2
    %v341 = vsel %vm337, %v335, %v339
    %v342 = vsel %vm338, %v336, %v340
    %345 = vrot.lane.b32.xlu0 %v341, 126
    %v346 = vpop.permute.xlu0 %345
    %347 = vrot.lane.b32.xlu0 %v342, 126
    %v348 = vpop.permute.xlu0 %347
    %v351 = vsel %vm93, %v341, %v346
    %v352 = vsel %vm93, %v342, %v348
    %353 = vrot.lane.b32.xlu0 %v341, 124
    %v354 = vpop.permute.xlu0 %353
    %355 = vrot.lane.b32.xlu0 %v342, 124
    %v356 = vpop.permute.xlu0 %355
    %v359 = vsel %vm93, %v346, %v354
    %v360 = vsel %vm93, %v348, %v356
    %363 = vrot.lane.b32.xlu0 %v359, 2
    %v364 = vpop.permute.xlu0 %363
    %365 = vrot.lane.b32.xlu0 %v360, 2
    %v366 = vpop.permute.xlu0 %365
    %v369 = vsel %vm93, 0.0, %v364
    %v370 = vsel %vm93, 0.0, %v366
    %373 = vrot.lane.b32.xlu0 %v351, 126
    %v374 = vpop.permute.xlu0 %373
    %375 = vrot.lane.b32.xlu0 %v352, 126
    %v376 = vpop.permute.xlu0 %375
    %v379 = vsel %vm93, %v374, 0.0
    %v380 = vsel %vm93, %v376, 0.0
    %v381 = vld [vmem:[%s3] sm:$0xf]
    %v382 = vld [vmem:[%s3 + $0x4] sm:$0xf]
    %v383 = vld [vmem:[%s3 + $0x8] sm:$0xf]
    %v384 = vld [vmem:[%s3 + $0xc] sm:$0xf]
    %v385 = vpack.c.bf16 %v370, %v369
    %v386 = vpack.c.bf16 %v352, %v351
    %v387 = vpack.c.bf16 %v360, %v359
    %v388 = vpack.c.bf16 %v380, %v379
    %v389 = vld [vmem:[%s6] sm:$0xff]
    %v390 = vld [vmem:[%s6 + $0x8] sm:$0xff]
    %v391 = vld [vmem:[%s6 + $0x10] sm:$0xff]
    %v392 = vld [vmem:[%s6 + $0x18] sm:$0xff]
    %394 = vset.pattern.permute.xlu0 0
    %395 = vperm.xlu0 %394, %v389
    %v396 = vpop.permute.xlu0 %395
    %399 = vset.pattern.permute.xlu0 0
    %400 = vperm.xlu0 %399, %v390
    %v401 = vpop.permute.xlu0 %400
    %404 = vset.pattern.permute.xlu0 0
    %405 = vperm.xlu0 %404, %v391
    %v406 = vpop.permute.xlu0 %405
    %409 = vset.pattern.permute.xlu0 0
    %410 = vperm.xlu0 %409, %v392
    %v411 = vpop.permute.xlu0 %410
    %v417 = vunpack.c.l.b16 %v381
    %v418 = vunpack.c.l.b16 %v382
    %v419 = vunpack.c.l.b16 %v383
    %v420 = vunpack.c.l.b16 %v384
    %v421 = vpack.c.b16 %v418, %v417
    %v422 = vpack.c.b16 %v420, %v419
    %vm423 = vcmask 523264
    %v425 = vsel %vm423, %v421, 0
    %v428 = vsel %vm423, %v422, 0
    %430 = vmatprep.subr.bf16.mxu0 0
    %431 = vmatpush1.bf16.msra.mxu0 0
    %432 = vmatprep.subr.bf16.mxu0 0
    %433 = vmatpush1.bf16.msra.mxu0 0
    %434 = vmatprep.subr.bf16.mxu0 0
    %435 = vmatpush1.bf16.msra.mxu0 0
    %436 = vmatprep.subr.bf16.mxu0 0
    %437 = vmatpush1.bf16.msra.mxu0 0
    %438 = vmatprep.subr.bf16.mxu0 0
    %439 = vmatpush1.bf16.msra.mxu0 %v388
    %440 = vmatprep.subr.bf16.mxu0 0
    %441 = vmatpush1.bf16.msra.mxu0 %v387
    %442 = vmatprep.subr.bf16.mxu0 0
    %443 = vmatpush1.bf16.msra.mxu0 %v386
    %444 = vmatprep.subr.bf16.mxu0 0
    %445 = vmatpush1.bf16.msra.mxu0 %v385
    %446 = vmatprep.subr.bf16.mxu0 0
    %447 = vmatpush2.bf16.msra.mxu0 0
    %448 = vmatprep.subr.bf16.mxu0 0
    %449 = vmatpush2.bf16.msra.mxu0 0
    %450 = vmatprep.subr.bf16.mxu0 0
    %451 = vmatpush2.bf16.msra.mxu0 0
    %452 = vmatprep.subr.bf16.mxu0 0
    %453 = vmatpush2.bf16.msra.mxu0 0
    %454 = vmatprep.subr.bf16.mxu0 0
    %455 = vmatpush2.bf16.msra.mxu0 0
    %456 = vmatprep.subr.bf16.mxu0 0
    %457 = vmatpush2.bf16.msra.mxu0 0
    %458 = vmatprep.subr.bf16.mxu0 0
    %459 = vmatpush2.bf16.msra.mxu0 0
    %460 = vmatprep.subr.bf16.mxu0 0
    %461 = vmatpush2.bf16.msra.mxu0 0
    %462 = vmatprep.mubr.bf16.mxu0 0
    %463 = vmatmul.mubr.bf16.gmra.mxu0 %v425
    %v464 = vpop.f32.mrf.mxu0
    %v465 = vadd.f32 %v396, %v464
    %v466 = vpop.f32.mrf.mxu0
    %v467 = vpop.f32.mrf.mxu0
    %v468 = vadd.f32 %v401, %v467
    %v469 = vpop.f32.mrf.mxu0
    %470 = vmatprep.mubr.bf16.mxu0 0
    %471 = vmatmul.mubr.bf16.gmra.mxu0 %v428
    %v472 = vpop.f32.mrf.mxu0
    %v473 = vadd.f32 %v406, %v472
    %v474 = vpop.f32.mrf.mxu0
    %v475 = vpop.f32.mrf.mxu0
    %v476 = vadd.f32 %v411, %v475
    %v477 = vpop.f32.mrf.mxu0
    %478 = vdwg.mxu0
    %v479 = vsel %vm95, %v465, 0.0
    %480 = vadd.xlane.f32.xlu0 %v479
    %v481 = vpop.xlane.xlu0 %480
    %v482 = vsel %vm95, %v468, 0.0
    %483 = vadd.xlane.f32.xlu0 %v482
    %v484 = vpop.xlane.xlu0 %483
    %v485 = vsel %vm95, %v473, 0.0
    %486 = vadd.xlane.f32.xlu0 %v485
    %v487 = vpop.xlane.xlu0 %486
    %v488 = vsel %vm95, %v476, 0.0
    %489 = vadd.xlane.f32.xlu0 %v488
    %v490 = vpop.xlane.xlu0 %489
    %v491 = vmul.f32 %v481, 0.25
    %v492 = vmul.f32 %v484, 0.25
    %v493 = vmul.f32 %v487, 0.25
    %v494 = vmul.f32 %v490, 0.25
    %v495 = vmul.f32 %v465, %v465
    %v496 = vmul.f32 %v468, %v468
    %v497 = vmul.f32 %v473, %v473
    %v498 = vmul.f32 %v476, %v476
    %v499 = vsel %vm95, %v495, 0.0
    %500 = vadd.xlane.f32.xlu0 %v499
    %v501 = vpop.xlane.xlu0 %500
    %v502 = vsel %vm95, %v496, 0.0
    %503 = vadd.xlane.f32.xlu0 %v502
    %v504 = vpop.xlane.xlu0 %503
    %v505 = vsel %vm95, %v497, 0.0
    %506 = vadd.xlane.f32.xlu0 %v505
    %v507 = vpop.xlane.xlu0 %506
    %v508 = vsel %vm95, %v498, 0.0
    %509 = vadd.xlane.f32.xlu0 %v508
    %v510 = vpop.xlane.xlu0 %509
    %v511 = vmul.f32 %v501, 0.25
    %v512 = vmul.f32 %v504, 0.25
    %v513 = vmul.f32 %v507, 0.25
    %v514 = vmul.f32 %v510, 0.25
    %v515 = vmul.f32 %v491, %v491
    %v516 = vmul.f32 %v492, %v492
    %v517 = vmul.f32 %v493, %v493
    %v518 = vmul.f32 %v494, %v494
    %v519 = vsub.f32 %v511, %v515
    %v520 = vsub.f32 %v512, %v516
    %v521 = vsub.f32 %v513, %v517
    %v522 = vsub.f32 %v514, %v518
    %v523 = vmax.f32 %v519, 0.0
    %v524 = vmax.f32 %v520, 0.0
    %v525 = vmax.f32 %v521, 0.0
    %v526 = vmax.f32 %v522, 0.0
    %v527 = vsub.f32 %v465, %v491
    %v528 = vsub.f32 %v468, %v492
    %v529 = vsub.f32 %v473, %v493
    %v530 = vsub.f32 %v476, %v494
    %v531 = vadd.f32 %v523, 1e-05
    %v532 = vadd.f32 %v524, 1e-05
    %v533 = vadd.f32 %v525, 1e-05
    %v534 = vadd.f32 %v526, 1e-05
    %v535 = vrsqrt.pop %v531
    %v536 = vrsqrt.pop %v532
    %v537 = vrsqrt.pop %v533
    %v538 = vrsqrt.pop %v534
    %v539 = vmul.f32 %v527, %v535
    %v540 = vmul.f32 %v528, %v536
    %v541 = vmul.f32 %v529, %v537
    %v542 = vmul.f32 %v530, %v538
    %543 = vset.pattern.permute.xlu0 1
    %544 = vperm.xlu0 %543, %v389
    %v545 = vpop.permute.xlu0 %544
    %547 = vset.pattern.permute.xlu0 1
    %548 = vperm.xlu0 %547, %v390
    %v549 = vpop.permute.xlu0 %548
    %551 = vset.pattern.permute.xlu0 1
    %552 = vperm.xlu0 %551, %v391
    %v553 = vpop.permute.xlu0 %552
    %555 = vset.pattern.permute.xlu0 1
    %556 = vperm.xlu0 %555, %v392
    %v557 = vpop.permute.xlu0 %556
    %v559 = vmul.f32 %v539, %v545
    %v560 = vmul.f32 %v540, %v549
    %v561 = vmul.f32 %v541, %v553
    %v562 = vmul.f32 %v542, %v557
    %563 = vset.pattern.permute.xlu0 2
    %564 = vperm.xlu0 %563, %v389
    %v565 = vpop.permute.xlu0 %564
    %567 = vset.pattern.permute.xlu0 2
    %568 = vperm.xlu0 %567, %v390
    %v569 = vpop.permute.xlu0 %568
    %571 = vset.pattern.permute.xlu0 2
    %572 = vperm.xlu0 %571, %v391
    %v573 = vpop.permute.xlu0 %572
    %575 = vset.pattern.permute.xlu0 2
    %576 = vperm.xlu0 %575, %v392
    %v577 = vpop.permute.xlu0 %576
    %v579 = vadd.f32 %v559, %v565
    %v580 = vadd.f32 %v560, %v569
    %v581 = vadd.f32 %v561, %v573
    %v582 = vadd.f32 %v562, %v577
    %vm583 = vcmp.gt.f32.partialorder %v579, 0.0
    %vm584 = vcmp.gt.f32.partialorder %v580, 0.0
    %vm585 = vcmp.gt.f32.partialorder %v581, 0.0
    %vm586 = vcmp.gt.f32.partialorder %v582, 0.0
    %v587 = vmul.f32 %v579, 0.2
    %v588 = vmul.f32 %v580, 0.2
    %v589 = vmul.f32 %v581, 0.2
    %v590 = vmul.f32 %v582, 0.2
    %v591 = vsel %vm583, %v579, %v587
    %v592 = vsel %vm584, %v580, %v588
    %v593 = vsel %vm585, %v581, %v589
    %v594 = vsel %vm586, %v582, %v590
    %599 = vrot.lane.b32.xlu0 %v591, 126
    %v600 = vpop.permute.xlu0 %599
    %601 = vrot.lane.b32.xlu0 %v592, 126
    %v602 = vpop.permute.xlu0 %601
    %603 = vrot.lane.b32.xlu0 %v593, 126
    %v604 = vpop.permute.xlu0 %603
    %605 = vrot.lane.b32.xlu0 %v594, 126
    %v606 = vpop.permute.xlu0 %605
    %v611 = vld [vmem:[%s7] sm:$0xf]
    %v612 = vld [vmem:[%s7 + $0x4] sm:$0x1]
    %v613 = vpack.c.bf16 %v592, %v591
    %v614 = vpack.c.bf16 %v594, %v593
    %v615 = vpack.c.bf16 %v602, %v600
    %v616 = vpack.c.bf16 %v606, %v604
    %v617 = vld [vmem:[%s8] sm:$0xff]
    %v618 = vld [vmem:[%s8 + $0x8] sm:$0x1]
    %620 = vset.pattern.permute.xlu0 0
    %621 = vperm.xlu0 %620, %v617
    %v622 = vpop.permute.xlu0 %621
    %625 = vset.pattern.permute.xlu0 0
    %626 = vperm.xlu0 %625, %v618
    %v627 = vpop.permute.xlu0 %626
    %v631 = vunpack.c.l.b16 %v611
    %v632 = vunpack.c.l.b16 %v612
    %v633 = vpack.c.b16 %v632, %v631
    %v635 = vsel %vm423, %v633, 0
    %637 = vmatprep.subr.bf16.mxu0 0
    %638 = vmatpush1.bf16.msra.mxu0 0
    %639 = vmatprep.subr.bf16.mxu0 0
    %640 = vmatpush1.bf16.msra.mxu0 0
    %641 = vmatprep.subr.bf16.mxu0 0
    %642 = vmatpush1.bf16.msra.mxu0 0
    %643 = vmatprep.subr.bf16.mxu0 0
    %644 = vmatpush1.bf16.msra.mxu0 0
    %645 = vmatprep.subr.bf16.mxu0 0
    %646 = vmatpush1.bf16.msra.mxu0 %v616
    %647 = vmatprep.subr.bf16.mxu0 0
    %648 = vmatpush1.bf16.msra.mxu0 %v615
    %649 = vmatprep.subr.bf16.mxu0 0
    %650 = vmatpush1.bf16.msra.mxu0 %v614
    %651 = vmatprep.subr.bf16.mxu0 0
    %652 = vmatpush1.bf16.msra.mxu0 %v613
    %653 = vmatprep.subr.bf16.mxu0 0
    %654 = vmatpush2.bf16.msra.mxu0 0
    %655 = vmatprep.subr.bf16.mxu0 0
    %656 = vmatpush2.bf16.msra.mxu0 0
    %657 = vmatprep.subr.bf16.mxu0 0
    %658 = vmatpush2.bf16.msra.mxu0 0
    %659 = vmatprep.subr.bf16.mxu0 0
    %660 = vmatpush2.bf16.msra.mxu0 0
    %661 = vmatprep.subr.bf16.mxu0 0
    %662 = vmatpush2.bf16.msra.mxu0 0
    %663 = vmatprep.subr.bf16.mxu0 0
    %664 = vmatpush2.bf16.msra.mxu0 0
    %665 = vmatprep.subr.bf16.mxu0 0
    %666 = vmatpush2.bf16.msra.mxu0 0
    %667 = vmatprep.subr.bf16.mxu0 0
    %668 = vmatpush2.bf16.msra.mxu0 0
    %669 = vmatprep.mubr.bf16.mxu0 0
    %670 = vmatmul.mubr.bf16.gmra.mxu0 %v635
    %v671 = vpop.f32.mrf.mxu0
    %v672 = vadd.f32 %v622, %v671
    %v673 = vpop.f32.mrf.mxu0
    %v674 = vpop.f32.mrf.mxu0
    %v675 = vadd.f32 %v627, %v674
    %v676 = vpop.f32.mrf.mxu0
    %677 = vdwg.mxu0
    %v678 = vsub.f32 0.0, %v672
    %v679 = vmul.f32 %v678, 1.442695
    %v680 = vpow.pop %v679
    %v681 = vadd.f32 %v680, 1.0
    %v682 = vrcp.pop %v681
    %v683 = vmul.f32 1.0, %v682
    %vm684 = vcmask 13313
    %v685 = vsel %vm684, %v672, -inf
    %v686 = vrot.slane %v685, 4
    %v687 = vmax.f32 %v685, %v686
    %v688 = vrot.slane %v687, 2
    %v689 = vmax.f32 %v687, %v688
    %v690 = vrot.slane %v689, 1
    %v691 = vmax.f32 %v689, %v690
    %v692 = vsub.f32 %v672, %v691
    %v693 = vmul.f32 %v692, 1.442695
    %v694 = vpow.pop %v693
    %v696 = vrot.slane %v694, 1
    %vm698 = vcmask 12288
    %v699 = vsel %vm698, %v696, 0.0
    %v700 = vrot.slane %v699, 4
    %v701 = vadd.f32 %v699, %v700
    %v702 = vrot.slane %v701, 2
    %v703 = vadd.f32 %v701, %v702
    %v704 = vrot.slane %v703, 1
    %v705 = vadd.f32 %v703, %v704
    %v706 = vrcp.pop %v705
    %v707 = vmul.f32 %v694, %v706
    %vm708 = vcmask 15366
    %v709 = vsel %vm708, %v672, -inf
    %vm710 = vcmask 8192
    %v711 = vsel %vm710, %v675, -inf
    %v712 = vmax.f32 %v709, %v711
    %v713 = vrot.slane %v712, 4
    %v714 = vmax.f32 %v712, %v713
    %v715 = vrot.slane %v714, 2
    %v716 = vmax.f32 %v714, %v715
    %v717 = vrot.slane %v716, 1
    %v718 = vmax.f32 %v716, %v717
    %v719 = vsub.f32 %v672, %v718
    %v720 = vsub.f32 %v675, %v718
    %v721 = vmul.f32 %v719, 1.442695
    %v722 = vpow.pop %v721
    %v723 = vmul.f32 %v720, 1.442695
    %v724 = vpow.pop %v723
    %vm727 = vcmask 1041408
    %v728 = vrot.slane %v722, 6
    %v729 = vrot.slane %v724, 6
    %v730 = vsel %vm727, %v728, %v729
    %vm732 = vcmask 10240
    %v733 = vsel %vm732, %v730, 0.0
    %v734 = vrot.slane %v733, 4
    %v735 = vadd.f32 %v733, %v734
    %v736 = vrot.slane %v735, 2
    %v737 = vadd.f32 %v735, %v736
    %v738 = vrot.slane %v737, 1
    %v739 = vadd.f32 %v737, %v738
    %v740 = vrcp.pop %v739
    %v741 = vmul.f32 %v722, %v740
    %v742 = vmul.f32 %v724, %v740
    %vm743 = vcmask 1040384
    %v744 = vsel %vm743, %v683, %v707
    %vm745 = vcmask 1045504
    %v746 = vsel %vm745, %v744, %v741
    %747 = vst.msk [vmem:[%s9] sm:$0xff] %vm93, %v746
    %748 = vst.msk [vmem:[%s9 + $0x8] sm:$0x1] %vm710, %v742
    // Predicated region
    $region50: #{forward.1} parent=1 // pred_check
      _
    $region51: #{forward.1} parent=1 // pred_check_branch
      %750 = sbr.rel (0) target = $region53
    $region52: #{forward.1} parent=1 // pred_region
      _
    $region53: #{forward.1} parent=1 // pred_fallthru
      _
    // Predicated region
    $region54: #{forward.1} parent=1 // pred_check
      _
    $region55: #{forward.1} parent=1 // pred_check_branch
      %752 = sbr.rel (0) target = $region57
    $region56: #{forward.1} parent=1 // pred_region
      _
    $region57: #{forward.1} parent=1 // pred_fallthru
      _
    %753 = vsyncpa [#allocation3], 1
    %754 = vsyncpa [#allocation5], 1

</llo_original>
